<compile_context>
chip_gen: v5e
topology: v5e:2x2
jax: 0.10.0
libtpu: 0.0.40
codegen_flags: <defaults>
</compile_context>

<pallas_src>
import functools

import jax
import jax.numpy as jnp
from jax import lax
from jax.experimental import pallas as pl
from jax.experimental.pallas import tpu as pltpu

# Module hyper-parameters (Xiayu.conv1 = Conv2d(3, 6, kernel_size=3, stride=1, padding=0)).
CIN, COUT, KH, KW = 3, 6, 3, 3
STRIDE, PAD = 1, 0
CPAD = 8                    # Cin padded to one full sublane tile (VMEM only, never HBM)
COUT_PAD = 8                # Cout padded so the output store is a full unmasked tile
KDIM = KH * KW * CPAD       # 72 = contraction dim of the single fused MXU matmul


def _conv_kernel(x_ref, w_ref, b_ref, o_ref, p_ref, *, n_img, W, HWp):
    """One grid step = n_img images, one fused K=72 matmul each.

    x_ref : (n_img, CIN, HWp)       raw input, flat spatial in the lane axis
    w_ref : (COUT_PAD, KDIM)        (kw, kh, c)-ordered, channel/cout-padded weight
    b_ref : (COUT_PAD, 1)           bias column
    o_ref : (n_img, COUT_PAD, HWp)  lane-dense output (cropped by the wrapper)
    p_ref : (KDIM, HWp)             im2col patches scratch; rows kw*24 + kh*8 + c
    """
    # Zero the channel-pad rows of the first slab once per step (rows 0..2 are
    # overwritten per image; all other slabs are derived by rolls so their pad
    # rows inherit these zeros).  Re-zeroing every step is megacore-safe.
    p_ref[pl.ds(CIN, CPAD - CIN), :] = jnp.zeros((CPAD - CIN, HWp), jnp.float32)

    w = w_ref[...]                                                  # resident (8, 72)
    bias_full = jnp.broadcast_to(b_ref[...], (COUT_PAD, HWp))       # hoisted out of loop

    def body(b, carry):
        # In-kernel channel pad 3 -> 8: slab 0 of the patches IS the padded image.
        p_ref[pl.ds(0, CIN), :] = x_ref[b]
        slab0 = p_ref[pl.ds(0, CPAD), :]                            # (8, HWp)

        # im2col via 4 static lane rolls (XLU), instead of 8 per-tap rolls:
        #   rows [kh*8 + c]         = x[c, p + kh*W]    (kh-stack: 2 rolls)
        #   rows [kw*24 + kh*8 + c] = x[c, p + kh*W + kw]  (2 rolls of the 24-row stack)
        # Wrapped lanes only land in rows/cols the wrapper crops (padding=0).
        p_ref[pl.ds(1 * CPAD, CPAD), :] = pltpu.roll(slab0, HWp - W, axis=1)
        p_ref[pl.ds(2 * CPAD, CPAD), :] = pltpu.roll(slab0, HWp - 2 * W, axis=1)
        stack = p_ref[pl.ds(0, 3 * CPAD), :]                        # (24, HWp)
        p_ref[pl.ds(3 * CPAD, 3 * CPAD), :] = pltpu.roll(stack, HWp - 1, axis=1)
        p_ref[pl.ds(6 * CPAD, 3 * CPAD), :] = pltpu.roll(stack, HWp - 2, axis=1)

        # Single fused MXU matmul (K=72); bias added on the VPU (free slot).
        acc = jnp.dot(w, p_ref[...], preferred_element_type=jnp.float32)  # (8, HWp)
        o_ref[b] = (acc + bias_full).astype(o_ref.dtype)            # unmasked full-tile store
        return carry

    # Short fixed trip count -> unrolled fori_loop (bounded live ranges, LLO-visible).
    lax.fori_loop(0, n_img, body, 0, unroll=True)


def _pick_batch_block(n, hwp, vmem_budget_bytes=8 << 20, cap=8):
    """Largest divisor of n that (a) keeps >=2 grid steps (v7x has 2 TCs to feed),
    (b) keeps the per-step VMEM estimate under a budget that is safe even at
    v5e's 16 MiB scoped default (and far under v7x's 64 MiB physical VMEM),
    and (c) stays <= cap."""
    per_img = 2 * (CIN + COUT_PAD) * hwp * 4        # double-buffered input + output
    fixed = KDIM * hwp * 4                          # patches scratch (single-buffered)
    max_by_vmem = max(1, (vmem_budget_bytes - fixed) // per_img)
    limit = int(min(cap, max_by_vmem, max(1, n // 2)))
    best = 1
    for d in range(1, limit + 1):
        if n % d == 0:
            best = d
    return best


def conv2d_pallas(x_nchw, weight, bias):
    """x_nchw: (N, 3, H, W); weight: (6, 3, 3, 3); bias: (6,).
    Returns (N, 6, Ho, Wo), matching torch.nn.Conv2d(3, 6, 3, stride=1, padding=0)."""
    N, Cin, H, W = x_nchw.shape
    assert Cin == CIN and H >= KH and W >= KW
    Ho, Wo = H - KH + 1, W - KW + 1
    HW = H * W
    HWp = ((HW + 127) // 128) * 128                  # lane-dense spatial width

    # Flatten spatial into lanes (free, row-major); pad lanes only if H*W % 128 != 0.
    # No channel pad in HBM any more -- that happens inside the kernel in VMEM.
    x_flat = x_nchw.reshape(N, CIN, HW)
    if HWp != HW:
        x_flat = jnp.pad(x_flat, ((0, 0), (0, 0), (0, HWp - HW)))

    # Weight: (O, C, KH, KW) -> (O, KW, KH, C) so the flattened K index is
    # kw*24 + kh*8 + c, matching the kernel's patches layout; pad C 3->8, O 6->8.
    w_t = jnp.transpose(weight, (0, 3, 2, 1))                                 # (6,3,3,3)
    w_pad = jnp.pad(w_t, ((0, COUT_PAD - COUT), (0, 0), (0, 0), (0, CPAD - CIN)))
    w_aug = w_pad.reshape(COUT_PAD, KDIM)                                     # (8, 72)
    b_col = jnp.pad(bias, (0, COUT_PAD - COUT)).reshape(COUT_PAD, 1)          # (8, 1)

    B_blk = _pick_batch_block(N, HWp)
    grid = (N // B_blk,)

    kernel = functools.partial(_conv_kernel, n_img=B_blk, W=W, HWp=HWp)

    out_flat = pl.pallas_call(
        kernel,
        out_shape=jax.ShapeDtypeStruct((N, COUT_PAD, HWp), x_nchw.dtype),
        grid_spec=pltpu.PrefetchScalarGridSpec(
            num_scalar_prefetch=0,
            grid=grid,
            in_specs=[
                pl.BlockSpec((B_blk, CIN, HWp), lambda n: (n, 0, 0)),
                pl.BlockSpec((COUT_PAD, KDIM), lambda n: (0, 0)),
                pl.BlockSpec((COUT_PAD, 1), lambda n: (0, 0)),
            ],
            out_specs=pl.BlockSpec((B_blk, COUT_PAD, HWp), lambda n: (n, 0, 0)),
            scratch_shapes=[
                pltpu.VMEM((KDIM, HWp), jnp.float32),    # im2col patches scratch
            ],
        ),
        compiler_params=pltpu.CompilerParams(
            dimension_semantics=("parallel",),           # batch blocks across TCs on v7x
        ),
    )(x_flat, w_aug, b_col)

    # Output was computed on the full padded (H, W) grid with lane-dense stores;
    # crop channels (8->6), lanes (HWp->H*W) and the valid spatial window.
    # TODO(synk): if the consumer can take the padded layout, fuse this crop there.
    return out_flat[:, :COUT, :HW].reshape(N, COUT, H, W)[:, :, :Ho, :Wo]


if __name__ == "__main__":
    key = jax.random.PRNGKey(0)
    kx, kw_key, kb_key = jax.random.split(key, 3)

    # Deterministic synthetic parameters mirroring Conv2d(3, 6, 3) shapes.
    fan_in = CIN * KH * KW
    bound = 1.0 / (fan_in ** 0.5)
    weight = jax.random.uniform(kw_key, (COUT, CIN, KH, KW), jnp.float32, -bound, bound)
    bias = jax.random.uniform(kb_key, (COUT,), jnp.float32, -bound, bound)

    # Small input consistent with the module: batch=2, channels=3, spatial=16x16.
    x = jax.random.normal(kx, (2, CIN, 16, 16), jnp.float32)

    out = conv2d_pallas(x, weight, bias)
    out = jax.block_until_ready(out)

    # Cross-check against XLA's conv to confirm exact forward semantics.
    ref = lax.conv_general_dilated(
        x, weight, window_strides=(1, 1), padding="VALID",
        dimension_numbers=("NCHW", "OIHW", "NCHW"),
    ) + bias.reshape(1, COUT, 1, 1)
    assert out.shape == (2, COUT, 14, 14)
    assert jnp.allclose(out, ref, atol=1e-5, rtol=1e-5)

    print("KERNEL_OK")
</pallas_src>

<mosaic_0001>
module attributes {stable_mosaic.version = 11 : i64} {
  func.func @_conv_kernel(%arg0: i32, %arg1: memref<1x3x256xf32, #tpu.memory_space<vmem>>, %arg2: memref<8x72xf32, #tpu.memory_space<vmem>>, %arg3: memref<8x1xf32, #tpu.memory_space<vmem>>, %arg4: memref<1x8x256xf32, #tpu.memory_space<vmem>>, %arg5: memref<72x256xf32, #tpu.memory_space<vmem>>) attributes {dimension_semantics = [#tpu.dimension_semantics<parallel>], iteration_bounds = array<i64: 2>, scalar_prefetch = 0 : i64, scratch_operands = 1 : i64, tpu.core_type = #tpu.core_type<tc>, window_params = [{transform_indices = @transform_0, window_bounds = array<i64: 1, 3, 256>}, {pipeline_mode = #tpu.pipeline_mode<synchronous>, transform_indices = @transform_1, window_bounds = array<i64: 8, 72>}, {pipeline_mode = #tpu.pipeline_mode<synchronous>, transform_indices = @transform_2, window_bounds = array<i64: 8, 1>}, {transform_indices = @transform_3, window_bounds = array<i64: 1, 8, 256>}]} {
    %cst = arith.constant 0.000000e+00 : f32
    %0 = vector.broadcast %cst : f32 to vector<5x256xf32>
    %c3 = arith.constant 3 : index
    %c0 = arith.constant 0 : index
    %1 = vector.load %arg5[%c3, %c0] : memref<72x256xf32, #tpu.memory_space<vmem>>, vector<5x256xf32>
    tpu.vector_store %arg5[%c3, %c0], %0 {strides = array<i32>} : memref<72x256xf32, #tpu.memory_space<vmem>>, vector<5x256xf32>,
    %c0_0 = arith.constant 0 : index
    %c0_1 = arith.constant 0 : index
    %2 = vector.load %arg2[%c0_0, %c0_1] : memref<8x72xf32, #tpu.memory_space<vmem>>, vector<8x72xf32>
    %c0_2 = arith.constant 0 : index
    %c0_3 = arith.constant 0 : index
    %3 = vector.load %arg3[%c0_2, %c0_3] : memref<8x1xf32, #tpu.memory_space<vmem>>, vector<8x1xf32>
    %4 = vector.shape_cast %3 : vector<8x1xf32> to vector<8x1xf32>
    %5 = vector.broadcast %4 : vector<8x1xf32> to vector<8x256xf32>
    %c0_i32 = arith.constant 0 : i32
    %6 = arith.index_cast %c0_i32 : i32 to index
    %c0_4 = arith.constant 0 : index
    %c0_5 = arith.constant 0 : index
    %7 = vector.load %arg1[%6, %c0_4, %c0_5] : memref<1x3x256xf32, #tpu.memory_space<vmem>>, vector<1x3x256xf32>
    %8 = vector.shape_cast %7 : vector<1x3x256xf32> to vector<3x256xf32>
    %c0_6 = arith.constant 0 : index
    %c0_7 = arith.constant 0 : index
    %9 = vector.load %arg5[%c0_6, %c0_7] : memref<72x256xf32, #tpu.memory_space<vmem>>, vector<3x256xf32>
    tpu.vector_store %arg5[%c0_6, %c0_7], %8 {strides = array<i32>} : memref<72x256xf32, #tpu.memory_space<vmem>>, vector<3x256xf32>,
    %c0_8 = arith.constant 0 : index
    %c0_9 = arith.constant 0 : index
    %10 = vector.load %arg5[%c0_8, %c0_9] : memref<72x256xf32, #tpu.memory_space<vmem>>, vector<8x256xf32>
    %c240_i32 = arith.constant 240 : i32
    %11 = tpu.dynamic_rotate %10 by %c240_i32 dim 1 : vector<8x256xf32>, i32 -> vector<8x256xf32>
    %c8 = arith.constant 8 : index
    %c0_10 = arith.constant 0 : index
    %12 = vector.load %arg5[%c8, %c0_10] : memref<72x256xf32, #tpu.memory_space<vmem>>, vector<8x256xf32>
    tpu.vector_store %arg5[%c8, %c0_10], %11 {strides = array<i32>} : memref<72x256xf32, #tpu.memory_space<vmem>>, vector<8x256xf32>,
    %c224_i32 = arith.constant 224 : i32
    %13 = tpu.dynamic_rotate %10 by %c224_i32 dim 1 : vector<8x256xf32>, i32 -> vector<8x256xf32>
    %c16 = arith.constant 16 : index
    %c0_11 = arith.constant 0 : index
    %14 = vector.load %arg5[%c16, %c0_11] : memref<72x256xf32, #tpu.memory_space<vmem>>, vector<8x256xf32>
    tpu.vector_store %arg5[%c16, %c0_11], %13 {strides = array<i32>} : memref<72x256xf32, #tpu.memory_space<vmem>>, vector<8x256xf32>,
    %c0_12 = arith.constant 0 : index
    %c0_13 = arith.constant 0 : index
    %15 = vector.load %arg5[%c0_12, %c0_13] : memref<72x256xf32, #tpu.memory_space<vmem>>, vector<24x256xf32>
    %c255_i32 = arith.constant 255 : i32
    %16 = tpu.dynamic_rotate %15 by %c255_i32 dim 1 : vector<24x256xf32>, i32 -> vector<24x256xf32>
    %c24 = arith.constant 24 : index
    %c0_14 = arith.constant 0 : index
    %17 = vector.load %arg5[%c24, %c0_14] : memref<72x256xf32, #tpu.memory_space<vmem>>, vector<24x256xf32>
    tpu.vector_store %arg5[%c24, %c0_14], %16 {strides = array<i32>} : memref<72x256xf32, #tpu.memory_space<vmem>>, vector<24x256xf32>,
    %c254_i32 = arith.constant 254 : i32
    %18 = tpu.dynamic_rotate %15 by %c254_i32 dim 1 : vector<24x256xf32>, i32 -> vector<24x256xf32>
    %c48 = arith.constant 48 : index
    %c0_15 = arith.constant 0 : index
    %19 = vector.load %arg5[%c48, %c0_15] : memref<72x256xf32, #tpu.memory_space<vmem>>, vector<24x256xf32>
    tpu.vector_store %arg5[%c48, %c0_15], %18 {strides = array<i32>} : memref<72x256xf32, #tpu.memory_space<vmem>>, vector<24x256xf32>,
    %c0_16 = arith.constant 0 : index
    %c0_17 = arith.constant 0 : index
    %20 = vector.load %arg5[%c0_16, %c0_17] : memref<72x256xf32, #tpu.memory_space<vmem>>, vector<72x256xf32>
    %cst_18 = arith.constant dense<0.000000e+00> : vector<8x256xf32>
    %21 = tpu.matmul %2, %20, %cst_18 {dimension_numbers = #tpu.dot_dimension_numbers<[1], [0], [0], [1], [0, 0, 1, 1], [], []>} : vector<8x72xf32>, vector<72x256xf32>, vector<8x256xf32> -> vector<8x256xf32>
    %22 = arith.addf %21, %5 : vector<8x256xf32>
    %23 = arith.index_cast %c0_i32 : i32 to index
    %c0_19 = arith.constant 0 : index
    %c0_20 = arith.constant 0 : index
    %24 = vector.load %arg4[%23, %c0_19, %c0_20] : memref<1x8x256xf32, #tpu.memory_space<vmem>>, vector<1x8x256xf32>
    %25 = vector.shape_cast %24 : vector<1x8x256xf32> to vector<8x256xf32>
    %26 = vector.shape_cast %22 : vector<8x256xf32> to vector<1x8x256xf32>
    tpu.vector_store %arg4[%23, %c0_19, %c0_20], %26 {strides = array<i32>} : memref<1x8x256xf32, #tpu.memory_space<vmem>>, vector<1x8x256xf32>,
    %c1_i32 = arith.constant 1 : i32
    return
  }
  func.func @transform_0(%arg0: i32) -> (i32, i32, i32) {
    %c0_i32 = arith.constant 0 : i32
    %c0_i32_0 = arith.constant 0 : i32
    %c0_i32_1 = arith.constant 0 : i32
    return %arg0, %c0_i32, %c0_i32_0 : i32, i32, i32
  }
  func.func @transform_1(%arg0: i32) -> (i32, i32) {
    %c0_i32 = arith.constant 0 : i32
    %c0_i32_0 = arith.constant 0 : i32
    %c0_i32_1 = arith.constant 0 : i32
    return %c0_i32, %c0_i32_0 : i32, i32
  }
  func.func @transform_2(%arg0: i32) -> (i32, i32) {
    %c0_i32 = arith.constant 0 : i32
    %c0_i32_0 = arith.constant 0 : i32
    %c0_i32_1 = arith.constant 0 : i32
    return %c0_i32, %c0_i32_0 : i32, i32
  }
  func.func @transform_3(%arg0: i32) -> (i32, i32, i32) {
    %c0_i32 = arith.constant 0 : i32
    %c0_i32_0 = arith.constant 0 : i32
    %c0_i32_1 = arith.constant 0 : i32
    return %arg0, %c0_i32, %c0_i32_0 : i32, i32, i32
  }
}

</mosaic_0001>

<llo_original>
// kernel: tpu_custom_call.1
$region0: #{tpu_custom_call.1}
  #allocation0 [shape = 'u32[]', space=smem, size = 0x4, offset = 0x4, fixed_abs, tag = 'smem constant byte address 0x4 - core index']
  #allocation1 [shape = 'u32[72,128]{1,0:T(1,128)}', space=vmem, size = 0x9000, scoped, tag = 'internal scratch']
  #allocation2 [shape = 'f32[72,256]{1,0:T(8,128)}', space=vmem, size = 0x12000, scoped, tag = 'scratch operand']
  %s0 = inlined_call_operand.vmem [shape: f32[2,3,256], index: 0, kind: input, shape index: {}]
  %s1 = inlined_call_operand.vmem [shape: f32[8,72], index: 1, kind: input, shape index: {}]
  %s2 = inlined_call_operand.vmem [shape: f32[8,1], index: 2, kind: input, shape index: {}]
  %s3 = inlined_call_operand.hbm [shape: f32[2,8,256], index: 3, kind: output, shape index: {}]
  %s4 = sld [smem:[#allocation0]]
  $region45: #{tpu_custom_call.1} parent=0
    _
  %s6 = ssub.s32 1, %s4
  %s7 = scalar_select 0, %s6, %s4
  $region1: #{tpu_custom_call.1} parent=0
    #allocation3 [shape = 'u8[16384]{0}', space=vmem, size = 0x4000, scoped, tag = 'output window, operand 0']
    #allocation4 [shape = 's32[2]{0}', space=sflag, size = 0x8, scoped, tag = 'scoped memory for tpu_custom_call.1']
    %8 = vsyncpa [#allocation4], 0
    %s9 = scalar_lea.sflag [#allocation4], 1
    %10 = vsyncpa %s9, 0
    loop: start=0, step=1, limit=4
    $region2: #{tpu_custom_call.1} parent=1 // loop_pre_header
      _
    $region3: #{tpu_custom_call.1} parent=1 // loop_header
      %s12 = sphi 0, %s16
      %p13 = scmp.ge.s32.totalorder %s12, 4
      %s22 = sphi 0, %s24
      %s25 = sphi 0, %s22
      %s26 = sphi 0, %s25
      %s42 = sphi 0, %s26
      %s46 = sphi 0, %s46
      %s48 = sphi 0, %s46
      %s49 = sphi 0, %s48
      %s63 = sphi 0, %s49
      %s67 = sphi 0, %s67
      %s69 = sphi 0, %s67
      %s70 = sphi 0, %s69
      %s84 = sphi 0, %s70
      %s90 = sphi 0, %s92
      %s93 = sphi 0, %s90
      %s94 = sphi 0, %s93
      %s110 = sphi 0, %s94
    $region4: #{tpu_custom_call.1} parent=1 // loop_header_branch
      %15 = sbr.rel (%p13) target = $region8
    $region5: #{tpu_custom_call.1} parent=1 // loop_body
      %s17 = ssub.s32 %s12, 1
      %s18 = ssub.s32 %s12, 2
      %s19 = sadd.s32 %s12, 1
      %s20 = ssub.s32 %s12, %s19
      %p21 = scmp.eq.s32.totalorder %s20, 0
      %s23 = sadd.s32 %s22, 1
      %s24 = scalar_select %p21, %s22, %s23
      %p27 = pneg %p21
      %p28 = scmp.eq.s32.totalorder %s12, 1
      %p29 = por %p27, %p28
      %p30 = scmp.ne.s32.totalorder %s22, %s25
      %p31 = scmp.eq.s32.totalorder %s12, 0
      %p32 = por %p30, %p31
      %p33 = scmp.ne.s32.totalorder %s22, %s25
      %p34 = scmp.eq.s32.totalorder %s17, 1
      %p35 = por %p33, %p34
      %p36 = scmp.ne.s32.totalorder %s25, %s26
      %p37 = scmp.eq.s32.totalorder %s17, 0
      %p38 = por %p36, %p37
      %p39 = scmp.ne.s32.totalorder %s25, %s26
      %p40 = scmp.eq.s32.totalorder %s18, 1
      %p41 = por %p39, %p40
      %p43 = scmp.ne.s32.totalorder %s26, %s42
      %p44 = scmp.eq.s32.totalorder %s18, 0
      %p45 = por %p43, %p44
      %s47 = sadd.s32 %s46, 1
      %p50 = scmp.eq.s32.totalorder %s12, 1
      %p51 = scmp.ne.s32.totalorder %s46, %s48
      %p52 = scmp.eq.s32.totalorder %s12, 0
      %p53 = por %p51, %p52
      %p54 = scmp.ne.s32.totalorder %s46, %s48
      %p55 = scmp.eq.s32.totalorder %s17, 1
      %p56 = por %p54, %p55
      %p57 = scmp.ne.s32.totalorder %s48, %s49
      %p58 = scmp.eq.s32.totalorder %s17, 0
      %p59 = por %p57, %p58
      %p60 = scmp.ne.s32.totalorder %s48, %s49
      %p61 = scmp.eq.s32.totalorder %s18, 1
      %p62 = por %p60, %p61
      %p64 = scmp.ne.s32.totalorder %s49, %s63
      %p65 = scmp.eq.s32.totalorder %s18, 0
      %p66 = por %p64, %p65
      %s68 = sadd.s32 %s67, 1
      %p71 = scmp.eq.s32.totalorder %s12, 1
      %p72 = scmp.ne.s32.totalorder %s67, %s69
      %p73 = scmp.eq.s32.totalorder %s12, 0
      %p74 = por %p72, %p73
      %p75 = scmp.ne.s32.totalorder %s67, %s69
      %p76 = scmp.eq.s32.totalorder %s17, 1
      %p77 = por %p75, %p76
      %p78 = scmp.ne.s32.totalorder %s69, %s70
      %p79 = scmp.eq.s32.totalorder %s17, 0
      %p80 = por %p78, %p79
      %p81 = scmp.ne.s32.totalorder %s69, %s70
      %p82 = scmp.eq.s32.totalorder %s18, 1
      %p83 = por %p81, %p82
      %p85 = scmp.ne.s32.totalorder %s70, %s84
      %p86 = scmp.eq.s32.totalorder %s18, 0
      %p87 = por %p85, %p86
      %s88 = ssub.s32 %s12, %s19
      %p89 = scmp.eq.s32.totalorder %s88, 0
      %s91 = sadd.s32 %s90, 1
      %s92 = scalar_select %p89, %s90, %s91
      %p95 = pneg %p89
      %p96 = scmp.eq.s32.totalorder %s12, 1
      %p97 = por %p95, %p96
      %p98 = scmp.ne.s32.totalorder %s90, %s93
      %p99 = scmp.eq.s32.totalorder %s12, 0
      %p100 = por %p98, %p99
      %p101 = scmp.ne.s32.totalorder %s90, %s93
      %p102 = scmp.eq.s32.totalorder %s17, 1
      %p103 = por %p101, %p102
      %p104 = scmp.ne.s32.totalorder %s93, %s94
      %p105 = scmp.eq.s32.totalorder %s17, 0
      %p106 = por %p104, %p105
      %p107 = scmp.ne.s32.totalorder %s93, %s94
      %p108 = scmp.eq.s32.totalorder %s18, 1
      %p109 = por %p107, %p108
      %p111 = scmp.ne.s32.totalorder %s94, %s110
      %p112 = scmp.eq.s32.totalorder %s18, 0
      %p113 = por %p111, %p112
      %p114 = scmp.le.s32.totalorder 1, %s12
      %p115 = scmp.lt.s32.totalorder %s12, 3
      %p116 = pnand %p114, %p115
      %p117 = pneg %p116
      // Predicated region
      $region9: #{tpu_custom_call.1} parent=5 // pred_check
        _
      $region10: #{tpu_custom_call.1} parent=5 // pred_check_branch
        %119 = sbr.rel (%p116) target = $region12
      $region11: #{tpu_custom_call.1} parent=5 // pred_region
        %s120 = ssub.s32 %s12, 1
        // Predicated region
        $region13: #{tpu_custom_call.1} parent=11 // pred_check
          %p121 = pneg %p59
        $region14: #{tpu_custom_call.1} parent=11 // pred_check_branch
          %123 = sbr.rel (%p121) target = $region16
        $region15: #{tpu_custom_call.1} parent=11 // pred_region
          _
        $region16: #{tpu_custom_call.1} parent=11 // pred_fallthru
          _
        // Predicated region
        $region17: #{tpu_custom_call.1} parent=11 // pred_check
          %p124 = pneg %p80
        $region18: #{tpu_custom_call.1} parent=11 // pred_check_branch
          %126 = sbr.rel (%p124) target = $region20
        $region19: #{tpu_custom_call.1} parent=11 // pred_region
          _
        $region20: #{tpu_custom_call.1} parent=11 // pred_fallthru
          _
      $region12: #{tpu_custom_call.1} parent=5 // pred_fallthru
        _
      %p127 = scmp.lt.s32.totalorder %s12, 2
      // Predicated region
      $region21: #{tpu_custom_call.1} parent=5 // pred_check
        %p128 = pneg %p127
      $region22: #{tpu_custom_call.1} parent=5 // pred_check_branch
        %130 = sbr.rel (%p128) target = $region24
      $region23: #{tpu_custom_call.1} parent=5 // pred_region
        // Predicated region
        $region25: #{tpu_custom_call.1} parent=23 // pred_check
          %p131 = pneg %p32
        $region26: #{tpu_custom_call.1} parent=23 // pred_check_branch
          %133 = sbr.rel (%p131) target = $region28
        $region27: #{tpu_custom_call.1} parent=23 // pred_region
          %p134 = scmp.lt.s32.totalorder %s12, 1
          %s135 = scalar_select %p134, %s12, 1
          %s136 = smul.addr %s135, 2
          %s137 = smul.addr %s136, 4
          %s138 = scalar_lea.vmem %s0, %s137
        $region28: #{tpu_custom_call.1} parent=23 // pred_fallthru
          _
      $region24: #{tpu_custom_call.1} parent=5 // pred_fallthru
        _
      %p139 = scmp.le.s32.totalorder 1, %s12
      %p140 = scmp.lt.s32.totalorder %s12, 3
      %p141 = pnand %p139, %p140
      %p142 = pneg %p141
      // Predicated region
      $region29: #{tpu_custom_call.1} parent=5 // pred_check
        _
      $region30: #{tpu_custom_call.1} parent=5 // pred_check_branch
        %144 = sbr.rel (%p141) target = $region32
      $region31: #{tpu_custom_call.1} parent=5 // pred_region
        %s145 = ssub.s32 %s12, 1
        %p146 = scmp.lt.s32.totalorder %s17, 1
        %s147 = scalar_select %p146, %s17, 1
        %s148 = smul.addr %s147, 2
        %s149 = smul.addr %s148, 4
        %s150 = scalar_lea.vmem %s0, %s149
        %p151 = pneg %p38
        %p152 = pneg %p35
        %p153 = pneg %p59
        %p154 = pneg %p56
        %p155 = pneg %p80
        %p156 = pneg %p77
        %p157 = pneg %p106
        %p158 = pneg %p103
        %s159 = sand.u32 %s93, 1
        %s160 = scalar_lea.sflag [#allocation4], %s159
        %s161 = sand.u32 %s93, 1
        %s162 = smul.addr %s161, 16
        %s163 = scalar_lea.vmem [#allocation3], %s162
        %p164 = scmp.lt.s32.totalorder %s17, 1
        %s165 = scalar_select %p164, %s17, 1
        %s166 = smul.addr %s165, 2
        %s167 = smul.addr %s166, 4
        %s168 = scalar_lea.vmem %s0, %s167
        %169 = vst [vmem:[#allocation2] sm:$0xf8] 0.0
        %170 = vst [vmem:[#allocation2 + $0x8] sm:$0xf8] 0.0
        %v171 = vld [vmem:[%s1] sm:$0xff]
        %v172 = vld [vmem:[%s2] sm:$0xff]
        %174 = vset.pattern.permute.xlu0 0
        %175 = vperm.xlu0 %174, %v172
        %v176 = vpop.permute.xlu0 %175
        %v178 = vld [vmem:[%s168] sm:$0x77]
        %180 = vst [vmem:[#allocation1] ss:$2 sm:$0xff] %v178
        %v181 = vld.sshfl [vmem:[#allocation1] sm:$0xff pattern:$0x75316420]
        %v182 = vld.sshfl [vmem:[#allocation1 + $0x8] sm:$0xff pattern:$0x75316420]
        %185 = vst [vmem:[#allocation2] sm:$0x7] %v181
        %186 = vst [vmem:[#allocation2 + $0x8] sm:$0x7] %v182
        %v187 = vld [vmem:[#allocation2] sm:$0xff]
        %v188 = vld [vmem:[#allocation2 + $0x8] sm:$0xff]
        %189 = vrot.lane.b32.xlu0 %v187, 112
        %v190 = vpop.permute.xlu0 %189
        %191 = vrot.lane.b32.xlu0 %v188, 112
        %v192 = vpop.permute.xlu0 %191
        %v193 = vlaneseq
        %v194 = vand.u32 %v193, 127
        %vm195 = vcmp.lt.s32.totalorder %v194, 112
        %v196 = vsel %vm195, %v190, %v192
        %v197 = vsel %vm195, %v192, %v190
        %198 = vst [vmem:[#allocation2 + $0x10] sm:$0xff] %v196
        %199 = vst [vmem:[#allocation2 + $0x18] sm:$0xff] %v197
        %200 = vrot.lane.b32.xlu0 %v187, 96
        %v201 = vpop.permute.xlu0 %200
        %202 = vrot.lane.b32.xlu0 %v188, 96
        %v203 = vpop.permute.xlu0 %202
        %vm204 = vcmp.lt.s32.totalorder %v194, 96
        %v205 = vsel %vm204, %v201, %v203
        %v206 = vsel %vm204, %v203, %v201
        %207 = vst [vmem:[#allocation2 + $0x20] sm:$0xff] %v205
        %208 = vst [vmem:[#allocation2 + $0x28] sm:$0xff] %v206
        %v209 = vld [vmem:[#allocation2] sm:$0xff]
        %v210 = vld [vmem:[#allocation2 + $0x8] sm:$0xff]
        %v211 = vld [vmem:[#allocation2 + $0x10] sm:$0xff]
        %v212 = vld [vmem:[#allocation2 + $0x18] sm:$0xff]
        %v213 = vld [vmem:[#allocation2 + $0x20] sm:$0xff]
        %v214 = vld [vmem:[#allocation2 + $0x28] sm:$0xff]
        %215 = vrot.lane.b32.xlu0 %v209, 127
        %v216 = vpop.permute.xlu0 %215
        %217 = vrot.lane.b32.xlu0 %v211, 127
        %v218 = vpop.permute.xlu0 %217
        %219 = vrot.lane.b32.xlu0 %v213, 127
        %v220 = vpop.permute.xlu0 %219
        %221 = vrot.lane.b32.xlu0 %v210, 127
        %v222 = vpop.permute.xlu0 %221
        %223 = vrot.lane.b32.xlu0 %v212, 127
        %v224 = vpop.permute.xlu0 %223
        %225 = vrot.lane.b32.xlu0 %v214, 127
        %v226 = vpop.permute.xlu0 %225
        %vm227 = vcmp.lt.s32.totalorder %v194, 127
        %v228 = vsel %vm227, %v216, %v222
        %v229 = vsel %vm227, %v218, %v224
        %v230 = vsel %vm227, %v220, %v226
        %v231 = vsel %vm227, %v222, %v216
        %v232 = vsel %vm227, %v224, %v218
        %v233 = vsel %vm227, %v226, %v220
        %234 = vst [vmem:[#allocation2 + $0x30] sm:$0xff] %v228
        %235 = vst [vmem:[#allocation2 + $0x38] sm:$0xff] %v231
        %236 = vst [vmem:[#allocation2 + $0x40] sm:$0xff] %v229
        %237 = vst [vmem:[#allocation2 + $0x48] sm:$0xff] %v232
        %238 = vst [vmem:[#allocation2 + $0x50] sm:$0xff] %v230
        %239 = vst [vmem:[#allocation2 + $0x58] sm:$0xff] %v233
        %240 = vrot.lane.b32.xlu0 %v209, 126
        %v241 = vpop.permute.xlu0 %240
        %242 = vrot.lane.b32.xlu0 %v211, 126
        %v243 = vpop.permute.xlu0 %242
        %244 = vrot.lane.b32.xlu0 %v213, 126
        %v245 = vpop.permute.xlu0 %244
        %246 = vrot.lane.b32.xlu0 %v210, 126
        %v247 = vpop.permute.xlu0 %246
        %248 = vrot.lane.b32.xlu0 %v212, 126
        %v249 = vpop.permute.xlu0 %248
        %250 = vrot.lane.b32.xlu0 %v214, 126
        %v251 = vpop.permute.xlu0 %250
        %vm252 = vcmp.lt.s32.totalorder %v194, 126
        %v253 = vsel %vm252, %v241, %v247
        %v254 = vsel %vm252, %v243, %v249
        %v255 = vsel %vm252, %v245, %v251
        %v256 = vsel %vm252, %v247, %v241
        %v257 = vsel %vm252, %v249, %v243
        %v258 = vsel %vm252, %v251, %v245
        %259 = vst [vmem:[#allocation2 + $0x60] sm:$0xff] %v253
        %260 = vst [vmem:[#allocation2 + $0x68] sm:$0xff] %v256
        %261 = vst [vmem:[#allocation2 + $0x70] sm:$0xff] %v254
        %262 = vst [vmem:[#allocation2 + $0x78] sm:$0xff] %v257
        %263 = vst [vmem:[#allocation2 + $0x80] sm:$0xff] %v255
        %264 = vst [vmem:[#allocation2 + $0x88] sm:$0xff] %v258
        %v265 = vld [vmem:[#allocation2] sm:$0xff]
        %v266 = vld [vmem:[#allocation2 + $0x8] sm:$0xff]
        %v267 = vld [vmem:[#allocation2 + $0x10] sm:$0xff]
        %v268 = vld [vmem:[#allocation2 + $0x18] sm:$0xff]
        %v269 = vld [vmem:[#allocation2 + $0x20] sm:$0xff]
        %v270 = vld [vmem:[#allocation2 + $0x28] sm:$0xff]
        %v271 = vld [vmem:[#allocation2 + $0x30] sm:$0xff]
        %v272 = vld [vmem:[#allocation2 + $0x38] sm:$0xff]
        %v273 = vld [vmem:[#allocation2 + $0x40] sm:$0xff]
        %v274 = vld [vmem:[#allocation2 + $0x48] sm:$0xff]
        %v275 = vld [vmem:[#allocation2 + $0x50] sm:$0xff]
        %v276 = vld [vmem:[#allocation2 + $0x58] sm:$0xff]
        %v277 = vld [vmem:[#allocation2 + $0x60] sm:$0xff]
        %v278 = vld [vmem:[#allocation2 + $0x68] sm:$0xff]
        %v279 = vld [vmem:[#allocation2 + $0x70] sm:$0xff]
        %v280 = vld [vmem:[#allocation2 + $0x78] sm:$0xff]
        %v281 = vld [vmem:[#allocation2 + $0x80] sm:$0xff]
        %v282 = vld [vmem:[#allocation2 + $0x88] sm:$0xff]
        %vm283 = vcmask 588800
        %v285 = vsel %vm283, %v171, 0
        %287 = vmatpush.msra.mxu0 0.0
        %288 = vmatpush.msra.mxu0 0.0
        %289 = vmatpush.msra.mxu0 0.0
        %290 = vmatpush.msra.mxu0 0.0
        %291 = vmatpush.msra.mxu0 0.0
        %292 = vmatpush.msra.mxu0 0.0
        %293 = vmatpush.msra.mxu0 0.0
        %294 = vmatpush.msra.mxu0 %v281
        %295 = vmatpush.msra.mxu0 %v279
        %296 = vmatpush.msra.mxu0 %v277
        %297 = vmatpush.msra.mxu0 %v275
        %298 = vmatpush.msra.mxu0 %v273
        %299 = vmatpush.msra.mxu0 %v271
        %300 = vmatpush.msra.mxu0 %v269
        %301 = vmatpush.msra.mxu0 %v267
        %302 = vmatpush.msra.mxu0 %v265
        %303 = vmatmul.f32.gmra.mxu0 %v285
        %v304 = vpop.f32.mrf.mxu0
        %v305 = vadd.f32 %v176, %v304
        %306 = vdwg.mxu0
        %307 = vmatpush.msra.mxu0 0.0
        %308 = vmatpush.msra.mxu0 0.0
        %309 = vmatpush.msra.mxu0 0.0
        %310 = vmatpush.msra.mxu0 0.0
        %311 = vmatpush.msra.mxu0 0.0
        %312 = vmatpush.msra.mxu0 0.0
        %313 = vmatpush.msra.mxu0 0.0
        %314 = vmatpush.msra.mxu0 %v282
        %315 = vmatpush.msra.mxu0 %v280
        %316 = vmatpush.msra.mxu0 %v278
        %317 = vmatpush.msra.mxu0 %v276
        %318 = vmatpush.msra.mxu0 %v274
        %319 = vmatpush.msra.mxu0 %v272
        %320 = vmatpush.msra.mxu0 %v270
        %321 = vmatpush.msra.mxu0 %v268
        %322 = vmatpush.msra.mxu0 %v266
        %323 = vmatmul.f32.gmra.mxu0 %v285
        %v324 = vpop.f32.mrf.mxu0
        %v325 = vadd.f32 %v176, %v324
        %326 = vdwg.mxu0
        %327 = vst [vmem:[%s163] sm:$0xff] %v305
        %328 = vst [vmem:[%s163 + $0x8] sm:$0xff] %v325
        %s329 = sand.u32 %s93, 1
        %s330 = scalar_lea.sflag [#allocation4], %s329
        %s331 = sand.u32 %s93, 1
        %s332 = smul.addr %s331, 16
        %s333 = scalar_lea.vmem [#allocation3], %s332
        // Predicated region
        $region33: #{tpu_custom_call.1} parent=31 // pred_check
          %p334 = pneg %p103
        $region34: #{tpu_custom_call.1} parent=31 // pred_check_branch
          %336 = sbr.rel (%p334) target = $region36
        $region35: #{tpu_custom_call.1} parent=31 // pred_region
          %338 = vsyncadd %s330, 0
          %s339 = smul.addr %s17, 2
          %s340 = smul.addr %s339, 8
          %s341 = scalar_lea.hbm %s3, %s340
          %s343 = sshll.u32 %s333, 4
          %s344 = int_to_ptr.vmem [resolvable:$true] %s343
          %s345 = sshll.u32 %s341, 4
          %s346 = int_to_ptr.hbm [resolvable:$true] %s345
          %348 = dma.vmem_to_hbm [thread:$0]  %s344, 256, %s346, %s330
        $region36: #{tpu_custom_call.1} parent=31 // pred_fallthru
          _
      $region32: #{tpu_custom_call.1} parent=5 // pred_fallthru
        _
      %p349 = scmp.le.s32.totalorder 2, %s12
      // Predicated region
      $region37: #{tpu_custom_call.1} parent=5 // pred_check
        %p350 = pneg %p349
      $region38: #{tpu_custom_call.1} parent=5 // pred_check_branch
        %352 = sbr.rel (%p350) target = $region40
      $region39: #{tpu_custom_call.1} parent=5 // pred_region
        %s353 = ssub.s32 %s12, 2
        // Predicated region
        $region41: #{tpu_custom_call.1} parent=39 // pred_check
          %p354 = pneg %p109
        $region42: #{tpu_custom_call.1} parent=39 // pred_check_branch
          %356 = sbr.rel (%p354) target = $region44
        $region43: #{tpu_custom_call.1} parent=39 // pred_region
          %s357 = sand.u32 %s94, 1
          %s358 = scalar_lea.sflag [#allocation4], %s357
          %s359 = sand.u32 %s94, 1
          %s360 = smul.addr %s359, 16
          %s361 = scalar_lea.vmem [#allocation3], %s360
          %363 = dma.done %s358, 256
        $region44: #{tpu_custom_call.1} parent=39 // pred_fallthru
          _
      $region40: #{tpu_custom_call.1} parent=5 // pred_fallthru
        _
    $region6: #{tpu_custom_call.1} parent=1 // loop_footer
      %s16 = sadd.s32 1, %s12
    $region7: #{tpu_custom_call.1} parent=1 // loop_footer_branch
      %11 = sbr.rel target = $region3
    $region8: #{tpu_custom_call.1} parent=1 // loop_exit
      _
    %364 = vsyncpa [#allocation4], 1
    %s365 = scalar_lea.sflag [#allocation4], 1
    %366 = vsyncpa %s365, 1

</llo_original>
